<compile_context>
chip_gen: v7x
topology: tpu7x:2x2x1
jax: 0.10.0
libtpu: 0.0.40
codegen_flags: <defaults>
</compile_context>

<pallas_src>
import jax
import jax.numpy as jnp
from jax.experimental import pallas as pl
from jax.experimental.pallas import tpu as pltpu


def _round_up(n, m):
    return ((n + m - 1) // m) * m


def net_kernel(x_ref, wsel_ref, b_ref, o_ref):
    # x_ref:    (TR, 128) f32 VMEM -- 16 samples per row, 8 features each (natural packing)
    # wsel_ref: (128, 16) f32 VMEM -- constant block-diagonal folded-weight tile (DMA'd once)
    # b_ref:    (1, 1)    f32 SMEM -- folded scalar bias
    # o_ref:    (TR, 16)  f32 VMEM -- 16 per-row outputs, already in batch order
    h = jnp.tanh(x_ref[...])                                   # EUP
    z = jnp.dot(h, wsel_ref[...],                              # small matmul on idle MXU
                preferred_element_type=jnp.float32)
    o_ref[...] = jax.nn.sigmoid(z + b_ref[0, 0])               # EUP


def net_forward(x, w1, b1, w2, b2, *, tr_max=4096):
    """x: (B, ...) -> (B, 1) probabilities.  Weights stored transposed vs PyTorch:
    w1: (8, 10), b1: (1, 10), w2: (10, 1), b2: (1, 1)."""
    B = x.shape[0]
    x2d = x.reshape(B, -1).astype(jnp.float32)                 # flatten(1)
    F = x2d.shape[1]
    assert F == 8, "Net expects 8 input features after flatten"

    # Fold fc1/fc2:  (h @ w1 + b1) @ w2 + b2 == h @ (w1 @ w2) + (b1 @ w2 + b2)
    w = (w1 @ w2).astype(jnp.float32).reshape(F)               # (8,)
    b = (b1 @ w2 + b2).astype(jnp.float32).reshape(1, 1)       # (1, 1)

    # Constant block-diagonal MXU tile:  Wsel[8k + f, k] = w[f]
    eye16 = jnp.eye(16, dtype=jnp.float32)
    wsel = (eye16[:, None, :] * w[None, :, None]).reshape(16 * F, 16)   # (128, 16)

    # View the batch as (R, 128): 16 samples/row, 8 features each.  Free reshape of
    # the natural (B, 8) layout -- no transpose pass.  Only pad when B % 16 != 0 or
    # B < 128 (callers supplying B % 16 == 0, B >= 128 incur zero extra HBM traffic).
    Bp = _round_up(max(B, 128), 16)
    if Bp != B:
        x2d = jnp.pad(x2d, ((0, Bp - B), (0, 0)))
    R = Bp // 16
    xr = x2d.reshape(R, 16 * F)                                 # (R, 128)

    # Large, balanced row tiles; keep >= 2 grid steps when possible (v7x megacore).
    # Partial last blocks are handled by Pallas via masked output writes.
    n_steps = max(pl.cdiv(R, tr_max), 2)
    TR = min(_round_up(pl.cdiv(R, n_steps), 8), tr_max)
    grid = (pl.cdiv(R, TR),)

    cost = pl.CostEstimate(
        flops=2 * R * 128 * 16 + 2 * R * 16,
        transcendentals=R * (128 + 16),                         # tanh per element + sigmoid
        bytes_accessed=4 * (R * 128 + R * 16 + 128 * 16 + 1),
    )

    out = pl.pallas_call(
        net_kernel,
        out_shape=jax.ShapeDtypeStruct((R, 16), jnp.float32),
        grid=grid,
        in_specs=[
            pl.BlockSpec((TR, 16 * F), lambda i: (i, 0)),           # x tiles (pipelined)
            pl.BlockSpec((16 * F, 16), lambda i: (0, 0)),           # constant weight tile, fetched once
            pl.BlockSpec(memory_space=pltpu.MemorySpace.SMEM),      # scalar bias in SMEM
        ],
        out_specs=pl.BlockSpec((TR, 16), lambda i: (i, 0)),
        compiler_params=pltpu.CompilerParams(
            dimension_semantics=("parallel",),                      # megacore split on v7x
        ),
        cost_estimate=cost,
    )(xr, wsel, b)

    # (R, 16) rows of 16 consecutive samples -> (Bp, 1) -> (B, 1); output is 8x
    # smaller than the input so this glue is cheap.
    return out.reshape(Bp, 1)[:B]
    # TODO(synk): accept bf16 activations end-to-end (halves HBM read traffic on a
    # memory-bound kernel); kept f32 here to match the reference module exactly.


def init_params(key, hidden_unit=10):
    # Deterministic synthetic init mimicking nn.Linear's uniform(-1/sqrt(fan_in), +1/sqrt(fan_in))
    k1, k2, k3, k4 = jax.random.split(key, 4)
    bound1 = 1.0 / jnp.sqrt(8.0)
    bound2 = 1.0 / jnp.sqrt(float(hidden_unit))
    w1 = jax.random.uniform(k1, (8, hidden_unit), jnp.float32, -bound1, bound1)
    b1 = jax.random.uniform(k2, (1, hidden_unit), jnp.float32, -bound1, bound1)
    w2 = jax.random.uniform(k3, (hidden_unit, 1), jnp.float32, -bound2, bound2)
    b2 = jax.random.uniform(k4, (1, 1), jnp.float32, -bound2, bound2)
    return w1, b1, w2, b2


if __name__ == "__main__":
    key = jax.random.PRNGKey(0)
    kx, kp = jax.random.split(key)
    w1, b1, w2, b2 = init_params(kp)

    def reference(x):
        xf = x.reshape(x.shape[0], -1)
        return jax.nn.sigmoid((jnp.tanh(xf) @ w1 + b1) @ w2 + b2)

    # Small Titanic-style batch, plus a batch that exercises multi-step tiling
    # and the masked partial last block.
    for B in (8, 1000):
        x = jax.random.normal(jax.random.fold_in(kx, B), (B, 8), jnp.float32)
        out = net_forward(x, w1, b1, w2, b2)
        jax.block_until_ready(out)
        ref = reference(x)
        assert out.shape == (B, 1), out.shape
        assert jnp.allclose(out, ref, atol=1e-5, rtol=1e-3), f"mismatch vs reference at B={B}"

    print("KERNEL_OK")
</pallas_src>

<mosaic_0001>
module attributes {stable_mosaic.version = 11 : i64} {
  func.func @net_kernel(%arg0: i32, %arg1: memref<8x128xf32, #tpu.memory_space<vmem>>, %arg2: memref<128x16xf32, #tpu.memory_space<vmem>>, %arg3: memref<1x1xf32, #tpu.memory_space<smem>>, %arg4: memref<8x16xf32, #tpu.memory_space<vmem>>) attributes {dimension_semantics = [#tpu.dimension_semantics<parallel>], iteration_bounds = array<i64: 1>, scalar_prefetch = 0 : i64, scratch_operands = 0 : i64, tpu.core_type = #tpu.core_type<tc>, window_params = [{transform_indices = @transform_0, window_bounds = array<i64: 8, 128>}, {pipeline_mode = #tpu.pipeline_mode<synchronous>, transform_indices = @transform_1, window_bounds = array<i64: 128, 16>}, {transform_indices = @transform_2, window_bounds = array<i64: 1, 1>}, {transform_indices = @transform_3, window_bounds = array<i64: 8, 16>}]} {
    %c0 = arith.constant 0 : index
    %c0_0 = arith.constant 0 : index
    %0 = vector.load %arg1[%c0, %c0_0] : memref<8x128xf32, #tpu.memory_space<vmem>>, vector<8x128xf32>
    %1 = math.tanh %0 : vector<8x128xf32>
    %c0_1 = arith.constant 0 : index
    %c0_2 = arith.constant 0 : index
    %2 = vector.load %arg2[%c0_1, %c0_2] : memref<128x16xf32, #tpu.memory_space<vmem>>, vector<128x16xf32>
    %cst = arith.constant dense<0.000000e+00> : vector<8x16xf32>
    %3 = tpu.matmul %1, %2, %cst {dimension_numbers = #tpu.dot_dimension_numbers<[1], [0], [0], [1], [0, 0, 1, 1], [], []>} : vector<8x128xf32>, vector<128x16xf32>, vector<8x16xf32> -> vector<8x16xf32>
    %c0_3 = arith.constant 0 : index
    %c0_4 = arith.constant 0 : index
    %4 = memref.load %arg3[%c0_3, %c0_4] : memref<1x1xf32, #tpu.memory_space<smem>>
    %5 = vector.broadcast %4 : f32 to vector<8x16xf32>
    %6 = arith.addf %3, %5 : vector<8x16xf32>
    %7 = arith.negf %6 : vector<8x16xf32>
    %8 = math.exp %7 : vector<8x16xf32>
    %cst_5 = arith.constant 1.000000e+00 : f32
    %9 = vector.broadcast %cst_5 : f32 to vector<8x16xf32>
    %10 = arith.addf %9, %8 : vector<8x16xf32>
    %11 = arith.divf %9, %10 : vector<8x16xf32>
    %c0_6 = arith.constant 0 : index
    %c0_7 = arith.constant 0 : index
    %12 = vector.load %arg4[%c0_6, %c0_7] : memref<8x16xf32, #tpu.memory_space<vmem>>, vector<8x16xf32>
    tpu.vector_store %arg4[%c0_6, %c0_7], %11 {strides = array<i32>} : memref<8x16xf32, #tpu.memory_space<vmem>>, vector<8x16xf32>,
    return
  }
  func.func @transform_0(%arg0: i32) -> (i32, i32) {
    %c0_i32 = arith.constant 0 : i32
    %c0_i32_0 = arith.constant 0 : i32
    return %arg0, %c0_i32 : i32, i32
  }
  func.func @transform_1(%arg0: i32) -> (i32, i32) {
    %c0_i32 = arith.constant 0 : i32
    %c0_i32_0 = arith.constant 0 : i32
    %c0_i32_1 = arith.constant 0 : i32
    return %c0_i32, %c0_i32_0 : i32, i32
  }
  func.func @transform_2(%arg0: i32) -> (i32, i32) {
    %c0_i32 = arith.constant 0 : i32
    %c0_i32_0 = arith.constant 0 : i32
    %c0_i32_1 = arith.constant 0 : i32
    return %c0_i32, %c0_i32_0 : i32, i32
  }
  func.func @transform_3(%arg0: i32) -> (i32, i32) {
    %c0_i32 = arith.constant 0 : i32
    %c0_i32_0 = arith.constant 0 : i32
    return %arg0, %c0_i32 : i32, i32
  }
}

</mosaic_0001>

<llo_original>
// kernel: tpu_custom_call.1
$region0: #{tpu_custom_call.1}
  #allocation0 [shape = 'u32[]', space=smem, size = 0x4, offset = 0x4, fixed_abs, tag = 'smem constant byte address 0x4 - core index']
  #allocation1 [shape = 'u32[144,128]{1,0:T(1,128)}', space=vmem, size = 0x12000, scoped, tag = 'internal scratch']
  #allocation2 [shape = 'f32[1,1]{1,0:T(1,128)S(6)}', space=smem, size = 0x200, scoped, tag = 'scoped memory for tpu_custom_call.1']
  %s0 = inlined_call_operand.vmem [shape: f32[8,128], index: 0, kind: input, shape index: {}]
  %s1 = inlined_call_operand.vmem [shape: f32[128,16], index: 1, kind: input, shape index: {}]
  %s2 = inlined_call_operand.<no memory space> [shape: f32[1,1], index: 2, kind: input, shape index: {}]
  %s3 = inlined_call_operand.hbm [shape: f32[8,16], index: 3, kind: output, shape index: {}]
  %s4 = sld [smem:[#allocation0]]
  $region22: #{tpu_custom_call.1} parent=0
    _
  %s6 = ssub.s32 1, %s4
  %s7 = scalar_select 0, %s6, %s4
  %8 = sst [smem:[#allocation2]] %s2
  $region1: #{tpu_custom_call.1} parent=0
    #allocation3 [shape = 'u8[4096]{0}', space=vmem, size = 0x1000, scoped, tag = 'output window, operand 0, single buffered']
    #allocation4 [shape = 's32[1]{0}', space=sflag, size = 0x4, scoped, tag = 'scoped memory for tpu_custom_call.1']
    %9 = vsyncpa [#allocation4], 0
    // Predicated region
    $region2: #{tpu_custom_call.1} parent=1 // pred_check
      _
    $region3: #{tpu_custom_call.1} parent=1 // pred_check_branch
      %11 = sbr.rel (0) target = $region5
    $region4: #{tpu_custom_call.1} parent=1 // pred_region
      _
    $region5: #{tpu_custom_call.1} parent=1 // pred_fallthru
      _
    // Predicated region
    $region6: #{tpu_custom_call.1} parent=1 // pred_check
      _
    $region7: #{tpu_custom_call.1} parent=1 // pred_check_branch
      %13 = sbr.rel (0) target = $region9
    $region8: #{tpu_custom_call.1} parent=1 // pred_region
      _
    $region9: #{tpu_custom_call.1} parent=1 // pred_fallthru
      _
    // Predicated region
    $region10: #{tpu_custom_call.1} parent=1 // pred_check
      _
    $region11: #{tpu_custom_call.1} parent=1 // pred_check_branch
      %15 = sbr.rel (0) target = $region13
    $region12: #{tpu_custom_call.1} parent=1 // pred_region
      _
    $region13: #{tpu_custom_call.1} parent=1 // pred_fallthru
      _
    %v16 = vld [vmem:[%s0] sm:$0xff]
    %v17 = vtanh.pop %v16
    %v18 = vld [vmem:[%s1] sm:$0xff]
    %v19 = vld [vmem:[%s1 + $0x8] sm:$0xff]
    %v20 = vld [vmem:[%s1 + $0x10] sm:$0xff]
    %v21 = vld [vmem:[%s1 + $0x18] sm:$0xff]
    %v22 = vld [vmem:[%s1 + $0x20] sm:$0xff]
    %v23 = vld [vmem:[%s1 + $0x28] sm:$0xff]
    %v24 = vld [vmem:[%s1 + $0x30] sm:$0xff]
    %v25 = vld [vmem:[%s1 + $0x38] sm:$0xff]
    %v26 = vld [vmem:[%s1 + $0x40] sm:$0xff]
    %v27 = vld [vmem:[%s1 + $0x48] sm:$0xff]
    %v28 = vld [vmem:[%s1 + $0x50] sm:$0xff]
    %v29 = vld [vmem:[%s1 + $0x58] sm:$0xff]
    %v30 = vld [vmem:[%s1 + $0x60] sm:$0xff]
    %v31 = vld [vmem:[%s1 + $0x68] sm:$0xff]
    %v32 = vld [vmem:[%s1 + $0x70] sm:$0xff]
    %v33 = vld [vmem:[%s1 + $0x78] sm:$0xff]
    %s34 = sld [smem:[#allocation2]]
    %v35 = vstv %s34
    %36 = vmatprep.subr.mxu0 0.0
    %37 = vmatpush1.msra.mxu0 %v18
    %38 = vmatprep.subr.mxu0 0.0
    %39 = vmatpush1.msra.mxu0 %v19
    %40 = vmatprep.subr.mxu0 0.0
    %41 = vmatpush1.msra.mxu0 %v20
    %42 = vmatprep.subr.mxu0 0.0
    %43 = vmatpush1.msra.mxu0 %v21
    %44 = vmatprep.subr.mxu0 0.0
    %45 = vmatpush1.msra.mxu0 %v22
    %46 = vmatprep.subr.mxu0 0.0
    %47 = vmatpush1.msra.mxu0 %v23
    %48 = vmatprep.subr.mxu0 0.0
    %49 = vmatpush1.msra.mxu0 %v24
    %50 = vmatprep.subr.mxu0 0.0
    %51 = vmatpush1.msra.mxu0 %v25
    %52 = vmatprep.subr.mxu0 0.0
    %53 = vmatpush1.msra.mxu0 %v26
    %54 = vmatprep.subr.mxu0 0.0
    %55 = vmatpush1.msra.mxu0 %v27
    %56 = vmatprep.subr.mxu0 0.0
    %57 = vmatpush1.msra.mxu0 %v28
    %58 = vmatprep.subr.mxu0 0.0
    %59 = vmatpush1.msra.mxu0 %v29
    %60 = vmatprep.subr.mxu0 0.0
    %61 = vmatpush1.msra.mxu0 %v30
    %62 = vmatprep.subr.mxu0 0.0
    %63 = vmatpush1.msra.mxu0 %v31
    %64 = vmatprep.subr.mxu0 0.0
    %65 = vmatpush1.msra.mxu0 %v32
    %66 = vmatprep.subr.mxu0 0.0
    %67 = vmatpush1.msra.mxu0 %v33
    %68 = vmatprep.subr.mxu0 0.0
    %69 = vmatpush1.msra.mxu0 0.0
    %70 = vmatprep.subr.mxu0 0.0
    %71 = vmatpush1.msra.mxu0 0.0
    %72 = vmatprep.subr.mxu0 0.0
    %73 = vmatpush1.msra.mxu0 0.0
    %74 = vmatprep.subr.mxu0 0.0
    %75 = vmatpush1.msra.mxu0 0.0
    %76 = vmatprep.subr.mxu0 0.0
    %77 = vmatpush1.msra.mxu0 0.0
    %78 = vmatprep.subr.mxu0 0.0
    %79 = vmatpush1.msra.mxu0 0.0
    %80 = vmatprep.subr.mxu0 0.0
    %81 = vmatpush1.msra.mxu0 0.0
    %82 = vmatprep.subr.mxu0 0.0
    %83 = vmatpush1.msra.mxu0 0.0
    %84 = vmatprep.subr.mxu0 0.0
    %85 = vmatpush1.msra.mxu0 0.0
    %86 = vmatprep.subr.mxu0 0.0
    %87 = vmatpush1.msra.mxu0 0.0
    %88 = vmatprep.subr.mxu0 0.0
    %89 = vmatpush1.msra.mxu0 0.0
    %90 = vmatprep.subr.mxu0 0.0
    %91 = vmatpush1.msra.mxu0 0.0
    %92 = vmatprep.subr.mxu0 0.0
    %93 = vmatpush1.msra.mxu0 0.0
    %94 = vmatprep.subr.mxu0 0.0
    %95 = vmatpush1.msra.mxu0 0.0
    %96 = vmatprep.subr.mxu0 0.0
    %97 = vmatpush1.msra.mxu0 0.0
    %98 = vmatprep.subr.mxu0 0.0
    %99 = vmatpush1.msra.mxu0 0.0
    %100 = vmatprep.mubr.f32.mxu0 0.0
    %101 = vmatmul.mubr.f32.gmra.mrb[0].mxu0 %v17
    %v102 = vpop.f32.mrb[0].mxu0
    %v103 = vadd.f32 %v35, %v102
    %v104 = vpop.f32.mrb[0].mxu0
    %105 = vdwg.mxu0
    %v106 = vxor.u32 %v103, 2147483648
    %v107 = vmul.f32 %v106, 1.442695
    %v108 = vpow.pop %v107
    %v109 = vadd.f32 %v108, 1.0
    %v110 = vrcp.pop %v109
    %v111 = vmul.f32 1.0, %v110
    %vm112 = vcmask 130048
    %113 = vst.msk [vmem:[#allocation3] sm:$0xff] %vm112, %v111
    // Predicated region
    $region14: #{tpu_custom_call.1} parent=1 // pred_check
      _
    $region15: #{tpu_custom_call.1} parent=1 // pred_check_branch
      %115 = sbr.rel (0) target = $region17
    $region16: #{tpu_custom_call.1} parent=1 // pred_region
      %s117 = ssub.s32 128, 128
      %118 = vsyncadd [#allocation4], %s117
      %s120 = sshll.u32 [#allocation3], 4
      %s121 = int_to_ptr.vmem [resolvable:$true] %s120
      %123 = dma.vmem_to_hbm [thread:$0]  %s121, 128, %s3, [#allocation4]
    $region17: #{tpu_custom_call.1} parent=1 // pred_fallthru
      _
    // Predicated region
    $region18: #{tpu_custom_call.1} parent=1 // pred_check
      _
    $region19: #{tpu_custom_call.1} parent=1 // pred_check_branch
      %125 = sbr.rel (0) target = $region21
    $region20: #{tpu_custom_call.1} parent=1 // pred_region
      %126 = dma.done [#allocation4], 128
    $region21: #{tpu_custom_call.1} parent=1 // pred_fallthru
      _
    %127 = vsyncpa [#allocation4], 1

</llo_original>
